<compile_context>
chip_gen: v5e
topology: v5e:2x2
jax: 0.10.0
libtpu: 0.0.40
codegen_flags: <defaults>
</compile_context>

<pallas_src>
import functools

import jax
import jax.numpy as jnp
from jax.experimental import pallas as pl
from jax.experimental.pallas import tpu as pltpu


def _round_up(x, m):
    return ((x + m - 1) // m) * m


def pack_params(weights, biases):
    """Pack per-layer (out, in) weights / (out,) biases into two padded blobs.

    Do this ONCE outside the training hot path.  Every layer gets a (D, D)
    slot (D = max layer width rounded up to a sublane multiple), zero-padded.
    The LAST layer is stored transposed ((in, out) inside its slot) so the
    kernel epilogue can be a VPU multiply + XLU sublane-reduce instead of an
    M=1 MXU matmul.
    """
    n_layers = len(weights)
    assert n_layers >= 2, "expect at least one hidden layer plus output layer"
    dims = (int(weights[0].shape[1]),) + tuple(int(w.shape[0]) for w in weights)
    D = _round_up(max(dims), 8)

    w_blob = jnp.zeros((n_layers, D, D), jnp.float32)
    b_blob = jnp.zeros((n_layers, D, 1), jnp.float32)
    for i, (w, b) in enumerate(zip(weights, biases)):
        o, k = int(w.shape[0]), int(w.shape[1])
        w32 = w.astype(jnp.float32)
        if i < n_layers - 1:
            w_blob = w_blob.at[i, :o, :k].set(w32)
        else:
            w_blob = w_blob.at[i, :k, :o].set(w32.T)   # last layer: transposed
        b_blob = b_blob.at[i, :o, 0].set(b.astype(jnp.float32))
    return w_blob, b_blob, dims


def _mlp_kernel(dims, matmul_dtype, x_ref, w_ref, b_ref, out_ref):
    """Fused MLP forward for one batch tile (features on sublanes, batch on lanes).

    x_ref  : (d_in, bt)        w_ref : (L, D, D)   (zero-padded, last layer ^T)
    b_ref  : (L, D, 1)         out_ref: (d_out, bt)
    """
    n_layers = len(dims) - 1
    d_in, d_out = dims[0], dims[-1]

    def mxu(w, h):
        if matmul_dtype is not None:                  # bf16 MXU inputs (v6e/v7x)
            w = w.astype(matmul_dtype)
            h = h.astype(matmul_dtype)
        return jnp.dot(w, h, preferred_element_type=jnp.float32)

    h = x_ref[...]
    if h.dtype != jnp.float32:
        h = h.astype(jnp.float32)

    # Hidden layers: MXU matmul + bias (VPU) + tanh (EUP), all in VMEM/vregs.
    # Layer 0 slices its padded weight down to the true input width so the
    # input never needs padding on the wrapper side.
    for i in range(n_layers - 1):
        w = w_ref[i]                                  # (D, D)
        if i == 0:
            w = w[:, :d_in]                           # (D, d_in)
        h = jnp.tanh(mxu(w, h) + b_ref[i])            # (D, bt)

    # Output layer (no activation), kept in f32 regardless of matmul_dtype.
    # For d_out == 1 use VPU broadcast-multiply + XLU sublane reduce so no
    # trailing MXU push/drain sits on the serial critical path.
    w_last = w_ref[n_layers - 1][:, :d_out]           # (D, d_out)  == W_last.T
    b_last = b_ref[n_layers - 1][:d_out, :]           # (d_out, 1)
    if d_out == 1:
        out = jnp.sum(w_last * h, axis=0, keepdims=True) + b_last
    else:
        out = jax.lax.dot_general(
            w_last, h, (((0,), (0,)), ((), ())),
            preferred_element_type=jnp.float32) + b_last
    out_ref[...] = out.astype(out_ref.dtype)


def dnn_forward(x, w_blob, b_blob, dims, *, batch_tile=None, matmul_dtype=None,
                inputs_transposed=False, return_transposed=False):
    """Pallas-fused forward of DNN(layers): x -> Linear/Tanh ... -> Linear.

    x:       (B, d_in)  (or (d_in, B) if inputs_transposed=True)
    w_blob, b_blob, dims: output of pack_params (pack once, reuse every call)
    batch_tile: rows per grid step; default = whole batch (single grid step,
                the fastest choice unless per-step work is large).  If set,
                must divide B and be a multiple of 128.
    matmul_dtype: e.g. jnp.bfloat16 on v6e/v7x (MXU inputs only; f32 accumulate
                  and f32 output layer).  None -> pure f32.
    """
    d_in, d_out = dims[0], dims[-1]

    # Lane-dense layout: batch on the 128-lane axis.  For a real PINN training
    # loop, store collocation points pre-transposed (inputs_transposed=True)
    # and consume the transposed output (return_transposed=True) so no XLA
    # relayout ops surround this microsecond-scale kernel.
    x_t = x if inputs_transposed else x.T             # (d_in, B)
    assert x_t.shape[0] == d_in
    B = x_t.shape[1]

    if batch_tile is None:
        batch_tile = B                                 # single grid step
    assert B % batch_tile == 0, "batch must be divisible by batch_tile"
    assert batch_tile == B or batch_tile % 128 == 0, (
        "batch_tile must be a multiple of 128 (or the full batch)")
    # Note: if B itself is not a multiple of 128 the full-batch block is still
    # legal, just lane-padded (masked partial stores) -- perf hazard only.
    num_tiles = B // batch_tile
    grid = (num_tiles,)

    in_specs = [
        pl.BlockSpec((d_in, batch_tile), lambda i: (0, i)),
        # Whole-blob, constant-index params: DMA'd once; Pallas skips re-fetch
        # on later steps because the block index never changes.
        pl.BlockSpec(w_blob.shape, lambda i: (0, 0, 0)),
        pl.BlockSpec(b_blob.shape, lambda i: (0, 0, 0)),
    ]
    out_spec = pl.BlockSpec((d_out, batch_tile), lambda i: (0, i))

    hidden = dims[1:-1]
    matmul_flops = 2 * B * sum(dims[i] * dims[i + 1] for i in range(len(dims) - 1))
    bias_flops = B * sum(dims[1:])
    transcendentals = B * sum(hidden)
    bytes_accessed = (x_t.size * x_t.dtype.itemsize
                      + w_blob.size * w_blob.dtype.itemsize
                      + b_blob.size * b_blob.dtype.itemsize
                      + B * d_out * x_t.dtype.itemsize)
    cost = pl.CostEstimate(flops=int(matmul_flops + bias_flops),
                           transcendentals=int(transcendentals),
                           bytes_accessed=int(bytes_accessed))

    kernel = functools.partial(_mlp_kernel, dims, matmul_dtype)

    out_t = pl.pallas_call(
        kernel,
        out_shape=jax.ShapeDtypeStruct((d_out, B), x_t.dtype),
        grid_spec=pltpu.PrefetchScalarGridSpec(
            num_scalar_prefetch=0,
            grid=grid,
            in_specs=in_specs,
            out_specs=out_spec,
        ),
        compiler_params=pltpu.CompilerParams(
            dimension_semantics=(("arbitrary",) if num_tiles == 1
                                 else ("parallel",))),
        cost_estimate=cost,
    )(x_t, w_blob, b_blob)

    return out_t if return_transposed else out_t.T    # (B, d_out)


def dnn_forward_ref(x, weights, biases):
    """Pure-JAX reference (mirrors torch nn.Sequential of Linear/Tanh)."""
    h = x
    n = len(weights)
    for i, (w, b) in enumerate(zip(weights, biases)):
        h = h @ w.T + b                                # w is (out, in)
        if i < n - 1:
            h = jnp.tanh(h)
    return h


def init_params(layers, key):
    """Deterministic init mimicking torch.nn.Linear (uniform +-1/sqrt(fan_in)).
    Weights stored (out, in), exactly like torch Linear's weight."""
    weights, biases = [], []
    for i in range(len(layers) - 1):
        fan_in, fan_out = layers[i], layers[i + 1]
        key, kw, kb = jax.random.split(key, 3)
        bound = 1.0 / jnp.sqrt(jnp.float32(fan_in))
        w = jax.random.uniform(kw, (fan_out, fan_in), jnp.float32, -bound, bound)
        b = jax.random.uniform(kb, (fan_out,), jnp.float32, -bound, bound)
        weights.append(w)
        biases.append(b)
    return weights, biases


if __name__ == "__main__":
    # Heat-equation PINN: inputs are (t, x, y) -> scalar u. layers=[3,32,32,32,1]
    layers = [3, 32, 32, 32, 1]
    batch = 512                       # multiple of 128 -> lane-dense, unmasked stores

    key = jax.random.PRNGKey(0)
    key, kx = jax.random.split(key)
    x = jax.random.normal(kx, (batch, layers[0]), jnp.float32)
    weights, biases = init_params(layers, key)

    # One-time packing (outside the per-step hot path).
    w_blob, b_blob, dims = pack_params(weights, biases)

    ref = dnn_forward_ref(x, weights, biases)

    # Default f32 path: single grid step, exact vs reference (all generations).
    out = dnn_forward(x, w_blob, b_blob, dims)
    out = jax.block_until_ready(out)
    assert out.shape == (batch, layers[-1])
    assert jnp.allclose(out, ref, atol=1e-5, rtol=1e-5), "f32 mismatch vs reference"

    # Optional bf16 MXU-input path (recommended on v6e/v7x): f32 accumulation,
    # f32 output layer; loose tolerance because matmul inputs are quantized.
    out_bf16 = dnn_forward(x, w_blob, b_blob, dims, matmul_dtype=jnp.bfloat16)
    out_bf16 = jax.block_until_ready(out_bf16)
    assert jnp.allclose(out_bf16, ref, atol=1e-1, rtol=1e-1), "bf16 path diverged"

    # TODO(synk): loss_/train use torch.autograd PDE residuals + an optimizer
    # step; those are training-time autodiff, not part of this forward kernel.
    print("KERNEL_OK")
</pallas_src>

<mosaic_0001>
module attributes {stable_mosaic.version = 11 : i64} {
  func.func @_mlp_kernel(%arg0: i32, %arg1: memref<3x512xf32, #tpu.memory_space<vmem>>, %arg2: memref<4x32x32xf32, #tpu.memory_space<vmem>>, %arg3: memref<4x32x1xf32, #tpu.memory_space<vmem>>, %arg4: memref<1x512xf32, #tpu.memory_space<vmem>>) attributes {dimension_semantics = [#tpu.dimension_semantics<arbitrary>], iteration_bounds = array<i64: 1>, scalar_prefetch = 0 : i64, scratch_operands = 0 : i64, tpu.core_type = #tpu.core_type<tc>, window_params = [{transform_indices = @transform_0, window_bounds = array<i64: 3, 512>}, {pipeline_mode = #tpu.pipeline_mode<synchronous>, transform_indices = @transform_1, window_bounds = array<i64: 4, 32, 32>}, {pipeline_mode = #tpu.pipeline_mode<synchronous>, transform_indices = @transform_2, window_bounds = array<i64: 4, 32, 1>}, {transform_indices = @transform_3, window_bounds = array<i64: 1, 512>}]} {
    %c0 = arith.constant 0 : index
    %c0_0 = arith.constant 0 : index
    %0 = vector.load %arg1[%c0, %c0_0] : memref<3x512xf32, #tpu.memory_space<vmem>>, vector<3x512xf32>
    %c0_1 = arith.constant 0 : index
    %c0_2 = arith.constant 0 : index
    %c0_3 = arith.constant 0 : index
    %1 = vector.load %arg2[%c0_1, %c0_2, %c0_3] : memref<4x32x32xf32, #tpu.memory_space<vmem>>, vector<1x32x32xf32>
    %2 = vector.shape_cast %1 : vector<1x32x32xf32> to vector<32x32xf32>
    %3 = vector.extract_strided_slice %2 {offsets = [0, 0], sizes = [32, 3], strides = [1, 1]} : vector<32x32xf32> to vector<32x3xf32>
    %cst = arith.constant dense<0.000000e+00> : vector<32x512xf32>
    %4 = tpu.matmul %3, %0, %cst {dimension_numbers = #tpu.dot_dimension_numbers<[1], [0], [0], [1], [0, 0, 1, 1], [], []>} : vector<32x3xf32>, vector<3x512xf32>, vector<32x512xf32> -> vector<32x512xf32>
    %c0_4 = arith.constant 0 : index
    %c0_5 = arith.constant 0 : index
    %c0_6 = arith.constant 0 : index
    %5 = vector.load %arg3[%c0_4, %c0_5, %c0_6] : memref<4x32x1xf32, #tpu.memory_space<vmem>>, vector<1x32x1xf32>
    %6 = vector.shape_cast %5 : vector<1x32x1xf32> to vector<32x1xf32>
    %7 = vector.broadcast %6 : vector<32x1xf32> to vector<32x512xf32>
    %8 = arith.addf %4, %7 : vector<32x512xf32>
    %9 = math.tanh %8 : vector<32x512xf32>
    %c1 = arith.constant 1 : index
    %c0_7 = arith.constant 0 : index
    %c0_8 = arith.constant 0 : index
    %10 = vector.load %arg2[%c1, %c0_7, %c0_8] : memref<4x32x32xf32, #tpu.memory_space<vmem>>, vector<1x32x32xf32>
    %11 = vector.shape_cast %10 : vector<1x32x32xf32> to vector<32x32xf32>
    %cst_9 = arith.constant dense<0.000000e+00> : vector<32x512xf32>
    %12 = tpu.matmul %11, %9, %cst_9 {dimension_numbers = #tpu.dot_dimension_numbers<[1], [0], [0], [1], [0, 0, 1, 1], [], []>} : vector<32x32xf32>, vector<32x512xf32>, vector<32x512xf32> -> vector<32x512xf32>
    %c1_10 = arith.constant 1 : index
    %c0_11 = arith.constant 0 : index
    %c0_12 = arith.constant 0 : index
    %13 = vector.load %arg3[%c1_10, %c0_11, %c0_12] : memref<4x32x1xf32, #tpu.memory_space<vmem>>, vector<1x32x1xf32>
    %14 = vector.shape_cast %13 : vector<1x32x1xf32> to vector<32x1xf32>
    %15 = vector.broadcast %14 : vector<32x1xf32> to vector<32x512xf32>
    %16 = arith.addf %12, %15 : vector<32x512xf32>
    %17 = math.tanh %16 : vector<32x512xf32>
    %c2 = arith.constant 2 : index
    %c0_13 = arith.constant 0 : index
    %c0_14 = arith.constant 0 : index
    %18 = vector.load %arg2[%c2, %c0_13, %c0_14] : memref<4x32x32xf32, #tpu.memory_space<vmem>>, vector<1x32x32xf32>
    %19 = vector.shape_cast %18 : vector<1x32x32xf32> to vector<32x32xf32>
    %cst_15 = arith.constant dense<0.000000e+00> : vector<32x512xf32>
    %20 = tpu.matmul %19, %17, %cst_15 {dimension_numbers = #tpu.dot_dimension_numbers<[1], [0], [0], [1], [0, 0, 1, 1], [], []>} : vector<32x32xf32>, vector<32x512xf32>, vector<32x512xf32> -> vector<32x512xf32>
    %c2_16 = arith.constant 2 : index
    %c0_17 = arith.constant 0 : index
    %c0_18 = arith.constant 0 : index
    %21 = vector.load %arg3[%c2_16, %c0_17, %c0_18] : memref<4x32x1xf32, #tpu.memory_space<vmem>>, vector<1x32x1xf32>
    %22 = vector.shape_cast %21 : vector<1x32x1xf32> to vector<32x1xf32>
    %23 = vector.broadcast %22 : vector<32x1xf32> to vector<32x512xf32>
    %24 = arith.addf %20, %23 : vector<32x512xf32>
    %25 = math.tanh %24 : vector<32x512xf32>
    %c3 = arith.constant 3 : index
    %c0_19 = arith.constant 0 : index
    %c0_20 = arith.constant 0 : index
    %26 = vector.load %arg2[%c3, %c0_19, %c0_20] : memref<4x32x32xf32, #tpu.memory_space<vmem>>, vector<1x32x32xf32>
    %27 = vector.shape_cast %26 : vector<1x32x32xf32> to vector<32x32xf32>
    %28 = vector.extract_strided_slice %27 {offsets = [0, 0], sizes = [32, 1], strides = [1, 1]} : vector<32x32xf32> to vector<32x1xf32>
    %c3_21 = arith.constant 3 : index
    %c0_22 = arith.constant 0 : index
    %c0_23 = arith.constant 0 : index
    %29 = vector.load %arg3[%c3_21, %c0_22, %c0_23] : memref<4x32x1xf32, #tpu.memory_space<vmem>>, vector<1x32x1xf32>
    %30 = vector.shape_cast %29 : vector<1x32x1xf32> to vector<32x1xf32>
    %31 = vector.extract_strided_slice %30 {offsets = [0, 0], sizes = [1, 1], strides = [1, 1]} : vector<32x1xf32> to vector<1x1xf32>
    %32 = vector.broadcast %28 : vector<32x1xf32> to vector<32x512xf32>
    %33 = arith.mulf %32, %25 : vector<32x512xf32>
    %cst_24 = arith.constant dense<0.000000e+00> : vector<512xf32>
    %34 = vector.multi_reduction <add>, %33, %cst_24 [0] : vector<32x512xf32> to vector<512xf32>
    %35 = vector.shape_cast %34 : vector<512xf32> to vector<1x512xf32>
    %36 = vector.broadcast %31 : vector<1x1xf32> to vector<1x512xf32>
    %37 = arith.addf %35, %36 : vector<1x512xf32>
    %c0_25 = arith.constant 0 : index
    %c0_26 = arith.constant 0 : index
    %38 = vector.load %arg4[%c0_25, %c0_26] : memref<1x512xf32, #tpu.memory_space<vmem>>, vector<1x512xf32>
    tpu.vector_store %arg4[%c0_25, %c0_26], %37 {strides = array<i32>} : memref<1x512xf32, #tpu.memory_space<vmem>>, vector<1x512xf32>,
    return
  }
  func.func @transform_0(%arg0: i32) -> (i32, i32) {
    %c0_i32 = arith.constant 0 : i32
    %c0_i32_0 = arith.constant 0 : i32
    return %c0_i32, %arg0 : i32, i32
  }
  func.func @transform_1(%arg0: i32) -> (i32, i32, i32) {
    %c0_i32 = arith.constant 0 : i32
    %c0_i32_0 = arith.constant 0 : i32
    %c0_i32_1 = arith.constant 0 : i32
    %c0_i32_2 = arith.constant 0 : i32
    return %c0_i32, %c0_i32_0, %c0_i32_1 : i32, i32, i32
  }
  func.func @transform_2(%arg0: i32) -> (i32, i32, i32) {
    %c0_i32 = arith.constant 0 : i32
    %c0_i32_0 = arith.constant 0 : i32
    %c0_i32_1 = arith.constant 0 : i32
    %c0_i32_2 = arith.constant 0 : i32
    return %c0_i32, %c0_i32_0, %c0_i32_1 : i32, i32, i32
  }
  func.func @transform_3(%arg0: i32) -> (i32, i32) {
    %c0_i32 = arith.constant 0 : i32
    %c0_i32_0 = arith.constant 0 : i32
    return %c0_i32, %arg0 : i32, i32
  }
}

</mosaic_0001>

<llo_original>
// kernel: tpu_custom_call.1
$region0: #{tpu_custom_call.1}
  #allocation0 [shape = 'u32[]', space=smem, size = 0x4, offset = 0x4, fixed_abs, tag = 'smem constant byte address 0x4 - core index']
  #allocation1 [shape = 'u32[72,128]{1,0:T(1,128)}', space=vmem, size = 0x9000, scoped, tag = 'internal scratch']
  %s0 = inlined_call_operand.hbm [shape: f32[3,512], index: 0, kind: input, shape index: {}]
  %s1 = inlined_call_operand.vmem [shape: f32[4,32,32], index: 1, kind: input, shape index: {}]
  %s2 = inlined_call_operand.vmem [shape: f32[4,32,1], index: 2, kind: input, shape index: {}]
  %s3 = inlined_call_operand.hbm [shape: f32[1,512], index: 3, kind: output, shape index: {}]
  %s4 = sld [smem:[#allocation0]]
  $region26: #{tpu_custom_call.1} parent=0
    _
  %s6 = ssub.s32 1, %s4
  %s7 = scalar_select 0, %s6, %s4
  $region1: #{tpu_custom_call.1} parent=0
    #allocation2 [shape = 'u8[8192]{0}', space=vmem, size = 0x2000, scoped, tag = 'input window, operand 0, single buffered']
    #allocation3 [shape = 's32[1]{0}', space=sflag, size = 0x4, scoped, tag = 'scoped memory for tpu_custom_call.1']
    #allocation4 [shape = 's32[1]{0}', space=sflag, size = 0x4, scoped, tag = 'scoped memory for tpu_custom_call.1']
    #allocation5 [shape = 'u8[2048]{0}', space=vmem, size = 0x800, scoped, tag = 'output window, operand 0, single buffered']
    %8 = vsyncpa [#allocation3], 0
    %9 = vsyncpa [#allocation4], 0
    // Predicated region
    $region2: #{tpu_custom_call.1} parent=1 // pred_check
      _
    $region3: #{tpu_custom_call.1} parent=1 // pred_check_branch
      %11 = sbr.rel (0) target = $region5
    $region4: #{tpu_custom_call.1} parent=1 // pred_region
      %13 = vsyncadd [#allocation3], 0
      %s15 = sshll.u32 %s0, 4
      %s16 = int_to_ptr.hbm [resolvable:$true] %s15
      %s17 = sshll.u32 [#allocation2], 4
      %s18 = int_to_ptr.vmem [resolvable:$true] %s17
      %20 = dma.hbm_to_vmem [thread:$0]  %s16, 256, %s18, [#allocation3]
    $region5: #{tpu_custom_call.1} parent=1 // pred_fallthru
      _
    // Predicated region
    $region6: #{tpu_custom_call.1} parent=1 // pred_check
      _
    $region7: #{tpu_custom_call.1} parent=1 // pred_check_branch
      %22 = sbr.rel (0) target = $region9
    $region8: #{tpu_custom_call.1} parent=1 // pred_region
      _
    $region9: #{tpu_custom_call.1} parent=1 // pred_fallthru
      _
    // Predicated region
    $region10: #{tpu_custom_call.1} parent=1 // pred_check
      _
    $region11: #{tpu_custom_call.1} parent=1 // pred_check_branch
      %24 = sbr.rel (0) target = $region13
    $region12: #{tpu_custom_call.1} parent=1 // pred_region
      _
    $region13: #{tpu_custom_call.1} parent=1 // pred_fallthru
      _
    // Predicated region
    $region14: #{tpu_custom_call.1} parent=1 // pred_check
      _
    $region15: #{tpu_custom_call.1} parent=1 // pred_check_branch
      %26 = sbr.rel (0) target = $region17
    $region16: #{tpu_custom_call.1} parent=1 // pred_region
      %28 = dma.done [#allocation3], 256
    $region17: #{tpu_custom_call.1} parent=1 // pred_fallthru
      _
    %v29 = vld [vmem:[#allocation2] sm:$0x77]
    %v30 = vld [vmem:[#allocation2 + $0x8] sm:$0x77]
    %v31 = vld [vmem:[%s1] sm:$0xff]
    %v32 = vld [vmem:[%s1 + $0x8] sm:$0xff]
    %v33 = vld [vmem:[%s1 + $0x10] sm:$0xff]
    %v34 = vld [vmem:[%s1 + $0x18] sm:$0xff]
    %v35 = vld [vmem:[%s2] sm:$0xff]
    %v36 = vld [vmem:[%s2 + $0x8] sm:$0xff]
    %v37 = vld [vmem:[%s2 + $0x10] sm:$0xff]
    %v38 = vld [vmem:[%s2 + $0x18] sm:$0xff]
    %40 = vset.pattern.permute.xlu0 0
    %41 = vperm.xlu0 %40, %v35
    %v42 = vpop.permute.xlu0 %41
    %45 = vset.pattern.permute.xlu0 0
    %46 = vperm.xlu0 %45, %v36
    %v47 = vpop.permute.xlu0 %46
    %50 = vset.pattern.permute.xlu0 0
    %51 = vperm.xlu0 %50, %v37
    %v52 = vpop.permute.xlu0 %51
    %55 = vset.pattern.permute.xlu0 0
    %56 = vperm.xlu0 %55, %v38
    %v57 = vpop.permute.xlu0 %56
    %61 = vst [vmem:[#allocation1] ss:$2 sm:$0xff] %v29
    %s62 = scalar_lea.vmem [#allocation1], 16
    %63 = vst [vmem:[%s62] ss:$2 sm:$0xff] %v30
    %v64 = vld.sshfl [vmem:[#allocation1] sm:$0xff pattern:$0x75316420]
    %v65 = vld.sshfl [vmem:[#allocation1 + $0x8] sm:$0xff pattern:$0x75316420]
    %v66 = vld.sshfl [vmem:[#allocation1 + $0x10] sm:$0xff pattern:$0x75316420]
    %v67 = vld.sshfl [vmem:[#allocation1 + $0x18] sm:$0xff pattern:$0x75316420]
    %vm68 = vcmask 23552
    %v70 = vsel %vm68, %v31, 0
    %v73 = vsel %vm68, %v32, 0
    %v76 = vsel %vm68, %v33, 0
    %v79 = vsel %vm68, %v34, 0
    %vm81 = vcmask 1042432
    %v82 = vsel %vm81, %v64, 0
    %v84 = vsel %vm81, %v65, 0
    %v86 = vsel %vm81, %v66, 0
    %v88 = vsel %vm81, %v67, 0
    %90 = vmatpush.msra.mxu0 0.0
    %91 = vmatpush.msra.mxu0 0.0
    %92 = vmatpush.msra.mxu0 0.0
    %93 = vmatpush.msra.mxu0 0.0
    %94 = vmatpush.msra.mxu0 0.0
    %95 = vmatpush.msra.mxu0 0.0
    %96 = vmatpush.msra.mxu0 0.0
    %97 = vmatpush.msra.mxu0 0.0
    %98 = vmatpush.msra.mxu0 0.0
    %99 = vmatpush.msra.mxu0 0.0
    %100 = vmatpush.msra.mxu0 0.0
    %101 = vmatpush.msra.mxu0 0.0
    %102 = vmatpush.msra.mxu0 0.0
    %103 = vmatpush.msra.mxu0 0.0
    %104 = vmatpush.msra.mxu0 0.0
    %105 = vmatpush.msra.mxu0 %v82
    %106 = vmatmul.f32.gmra.mxu0 %v70
    %v107 = vpop.f32.mrf.mxu0
    %v108 = vadd.f32 %v42, %v107
    %109 = vmatmul.f32.gmra.mxu0 %v73
    %v110 = vpop.f32.mrf.mxu0
    %v111 = vadd.f32 %v47, %v110
    %112 = vmatmul.f32.gmra.mxu0 %v76
    %v113 = vpop.f32.mrf.mxu0
    %v114 = vadd.f32 %v52, %v113
    %115 = vmatmul.f32.gmra.mxu0 %v79
    %v116 = vpop.f32.mrf.mxu0
    %v117 = vadd.f32 %v57, %v116
    %118 = vdwg.mxu0
    %119 = vmatpush.msra.mxu0 0.0
    %120 = vmatpush.msra.mxu0 0.0
    %121 = vmatpush.msra.mxu0 0.0
    %122 = vmatpush.msra.mxu0 0.0
    %123 = vmatpush.msra.mxu0 0.0
    %124 = vmatpush.msra.mxu0 0.0
    %125 = vmatpush.msra.mxu0 0.0
    %126 = vmatpush.msra.mxu0 0.0
    %127 = vmatpush.msra.mxu0 0.0
    %128 = vmatpush.msra.mxu0 0.0
    %129 = vmatpush.msra.mxu0 0.0
    %130 = vmatpush.msra.mxu0 0.0
    %131 = vmatpush.msra.mxu0 0.0
    %132 = vmatpush.msra.mxu0 0.0
    %133 = vmatpush.msra.mxu0 0.0
    %134 = vmatpush.msra.mxu0 %v84
    %135 = vmatmul.f32.gmra.mxu0 %v70
    %v136 = vpop.f32.mrf.mxu0
    %v137 = vadd.f32 %v42, %v136
    %138 = vmatmul.f32.gmra.mxu0 %v73
    %v139 = vpop.f32.mrf.mxu0
    %v140 = vadd.f32 %v47, %v139
    %141 = vmatmul.f32.gmra.mxu0 %v76
    %v142 = vpop.f32.mrf.mxu0
    %v143 = vadd.f32 %v52, %v142
    %144 = vmatmul.f32.gmra.mxu0 %v79
    %v145 = vpop.f32.mrf.mxu0
    %v146 = vadd.f32 %v57, %v145
    %147 = vdwg.mxu0
    %148 = vmatpush.msra.mxu0 0.0
    %149 = vmatpush.msra.mxu0 0.0
    %150 = vmatpush.msra.mxu0 0.0
    %151 = vmatpush.msra.mxu0 0.0
    %152 = vmatpush.msra.mxu0 0.0
    %153 = vmatpush.msra.mxu0 0.0
    %154 = vmatpush.msra.mxu0 0.0
    %155 = vmatpush.msra.mxu0 0.0
    %156 = vmatpush.msra.mxu0 0.0
    %157 = vmatpush.msra.mxu0 0.0
    %158 = vmatpush.msra.mxu0 0.0
    %159 = vmatpush.msra.mxu0 0.0
    %160 = vmatpush.msra.mxu0 0.0
    %161 = vmatpush.msra.mxu0 0.0
    %162 = vmatpush.msra.mxu0 0.0
    %163 = vmatpush.msra.mxu0 %v86
    %164 = vmatmul.f32.gmra.mxu0 %v70
    %v165 = vpop.f32.mrf.mxu0
    %v166 = vadd.f32 %v42, %v165
    %167 = vmatmul.f32.gmra.mxu0 %v73
    %v168 = vpop.f32.mrf.mxu0
    %v169 = vadd.f32 %v47, %v168
    %170 = vmatmul.f32.gmra.mxu0 %v76
    %v171 = vpop.f32.mrf.mxu0
    %v172 = vadd.f32 %v52, %v171
    %173 = vmatmul.f32.gmra.mxu0 %v79
    %v174 = vpop.f32.mrf.mxu0
    %v175 = vadd.f32 %v57, %v174
    %176 = vdwg.mxu0
    %177 = vmatpush.msra.mxu0 0.0
    %178 = vmatpush.msra.mxu0 0.0
    %179 = vmatpush.msra.mxu0 0.0
    %180 = vmatpush.msra.mxu0 0.0
    %181 = vmatpush.msra.mxu0 0.0
    %182 = vmatpush.msra.mxu0 0.0
    %183 = vmatpush.msra.mxu0 0.0
    %184 = vmatpush.msra.mxu0 0.0
    %185 = vmatpush.msra.mxu0 0.0
    %186 = vmatpush.msra.mxu0 0.0
    %187 = vmatpush.msra.mxu0 0.0
    %188 = vmatpush.msra.mxu0 0.0
    %189 = vmatpush.msra.mxu0 0.0
    %190 = vmatpush.msra.mxu0 0.0
    %191 = vmatpush.msra.mxu0 0.0
    %192 = vmatpush.msra.mxu0 %v88
    %193 = vmatmul.f32.gmra.mxu0 %v70
    %v194 = vpop.f32.mrf.mxu0
    %v195 = vadd.f32 %v42, %v194
    %196 = vmatmul.f32.gmra.mxu0 %v73
    %v197 = vpop.f32.mrf.mxu0
    %v198 = vadd.f32 %v47, %v197
    %199 = vmatmul.f32.gmra.mxu0 %v76
    %v200 = vpop.f32.mrf.mxu0
    %v201 = vadd.f32 %v52, %v200
    %202 = vmatmul.f32.gmra.mxu0 %v79
    %v203 = vpop.f32.mrf.mxu0
    %v204 = vadd.f32 %v57, %v203
    %205 = vdwg.mxu0
    %v206 = vtanh.pop %v108
    %v207 = vtanh.pop %v137
    %v208 = vtanh.pop %v166
    %v209 = vtanh.pop %v195
    %v210 = vtanh.pop %v111
    %v211 = vtanh.pop %v140
    %v212 = vtanh.pop %v169
    %v213 = vtanh.pop %v198
    %v214 = vtanh.pop %v114
    %v215 = vtanh.pop %v143
    %v216 = vtanh.pop %v172
    %v217 = vtanh.pop %v201
    %v218 = vtanh.pop %v117
    %v219 = vtanh.pop %v146
    %v220 = vtanh.pop %v175
    %v221 = vtanh.pop %v204
    %s222 = scalar_lea.vmem %s1, 32
    %v223 = vld [vmem:[%s222] sm:$0xff]
    %v224 = vld [vmem:[%s222 + $0x8] sm:$0xff]
    %v225 = vld [vmem:[%s222 + $0x10] sm:$0xff]
    %v226 = vld [vmem:[%s222 + $0x18] sm:$0xff]
    %s227 = scalar_lea.vmem %s2, 32
    %v228 = vld [vmem:[%s227] sm:$0xff]
    %v229 = vld [vmem:[%s227 + $0x8] sm:$0xff]
    %v230 = vld [vmem:[%s227 + $0x10] sm:$0xff]
    %v231 = vld [vmem:[%s227 + $0x18] sm:$0xff]
    %233 = vset.pattern.permute.xlu0 0
    %234 = vperm.xlu0 %233, %v228
    %v235 = vpop.permute.xlu0 %234
    %238 = vset.pattern.permute.xlu0 0
    %239 = vperm.xlu0 %238, %v229
    %v240 = vpop.permute.xlu0 %239
    %243 = vset.pattern.permute.xlu0 0
    %244 = vperm.xlu0 %243, %v230
    %v245 = vpop.permute.xlu0 %244
    %248 = vset.pattern.permute.xlu0 0
    %249 = vperm.xlu0 %248, %v231
    %v250 = vpop.permute.xlu0 %249
    %vm252 = vcmask 261120
    %v254 = vsel %vm252, %v223, 0
    %v257 = vsel %vm252, %v224, 0
    %v260 = vsel %vm252, %v225, 0
    %v263 = vsel %vm252, %v226, 0
    %265 = vmatpush.msra.mxu0 0.0
    %266 = vmatpush.msra.mxu0 0.0
    %267 = vmatpush.msra.mxu0 0.0
    %268 = vmatpush.msra.mxu0 0.0
    %269 = vmatpush.msra.mxu0 0.0
    %270 = vmatpush.msra.mxu0 0.0
    %271 = vmatpush.msra.mxu0 0.0
    %272 = vmatpush.msra.mxu0 0.0
    %273 = vmatpush.msra.mxu0 0.0
    %274 = vmatpush.msra.mxu0 0.0
    %275 = vmatpush.msra.mxu0 0.0
    %276 = vmatpush.msra.mxu0 0.0
    %277 = vmatpush.msra.mxu0 %v218
    %278 = vmatpush.msra.mxu0 %v214
    %279 = vmatpush.msra.mxu0 %v210
    %280 = vmatpush.msra.mxu0 %v206
    %281 = vmatmul.f32.gmra.mxu0 %v254
    %v282 = vpop.f32.mrf.mxu0
    %v283 = vadd.f32 %v235, %v282
    %284 = vmatmul.f32.gmra.mxu0 %v257
    %v285 = vpop.f32.mrf.mxu0
    %v286 = vadd.f32 %v240, %v285
    %287 = vmatmul.f32.gmra.mxu0 %v260
    %v288 = vpop.f32.mrf.mxu0
    %v289 = vadd.f32 %v245, %v288
    %290 = vmatmul.f32.gmra.mxu0 %v263
    %v291 = vpop.f32.mrf.mxu0
    %v292 = vadd.f32 %v250, %v291
    %293 = vdwg.mxu0
    %294 = vmatpush.msra.mxu0 0.0
    %295 = vmatpush.msra.mxu0 0.0
    %296 = vmatpush.msra.mxu0 0.0
    %297 = vmatpush.msra.mxu0 0.0
    %298 = vmatpush.msra.mxu0 0.0
    %299 = vmatpush.msra.mxu0 0.0
    %300 = vmatpush.msra.mxu0 0.0
    %301 = vmatpush.msra.mxu0 0.0
    %302 = vmatpush.msra.mxu0 0.0
    %303 = vmatpush.msra.mxu0 0.0
    %304 = vmatpush.msra.mxu0 0.0
    %305 = vmatpush.msra.mxu0 0.0
    %306 = vmatpush.msra.mxu0 %v219
    %307 = vmatpush.msra.mxu0 %v215
    %308 = vmatpush.msra.mxu0 %v211
    %309 = vmatpush.msra.mxu0 %v207
    %310 = vmatmul.f32.gmra.mxu0 %v254
    %v311 = vpop.f32.mrf.mxu0
    %v312 = vadd.f32 %v235, %v311
    %313 = vmatmul.f32.gmra.mxu0 %v257
    %v314 = vpop.f32.mrf.mxu0
    %v315 = vadd.f32 %v240, %v314
    %316 = vmatmul.f32.gmra.mxu0 %v260
    %v317 = vpop.f32.mrf.mxu0
    %v318 = vadd.f32 %v245, %v317
    %319 = vmatmul.f32.gmra.mxu0 %v263
    %v320 = vpop.f32.mrf.mxu0
    %v321 = vadd.f32 %v250, %v320
    %322 = vdwg.mxu0
    %323 = vmatpush.msra.mxu0 0.0
    %324 = vmatpush.msra.mxu0 0.0
    %325 = vmatpush.msra.mxu0 0.0
    %326 = vmatpush.msra.mxu0 0.0
    %327 = vmatpush.msra.mxu0 0.0
    %328 = vmatpush.msra.mxu0 0.0
    %329 = vmatpush.msra.mxu0 0.0
    %330 = vmatpush.msra.mxu0 0.0
    %331 = vmatpush.msra.mxu0 0.0
    %332 = vmatpush.msra.mxu0 0.0
    %333 = vmatpush.msra.mxu0 0.0
    %334 = vmatpush.msra.mxu0 0.0
    %335 = vmatpush.msra.mxu0 %v220
    %336 = vmatpush.msra.mxu0 %v216
    %337 = vmatpush.msra.mxu0 %v212
    %338 = vmatpush.msra.mxu0 %v208
    %339 = vmatmul.f32.gmra.mxu0 %v254
    %v340 = vpop.f32.mrf.mxu0
    %v341 = vadd.f32 %v235, %v340
    %342 = vmatmul.f32.gmra.mxu0 %v257
    %v343 = vpop.f32.mrf.mxu0
    %v344 = vadd.f32 %v240, %v343
    %345 = vmatmul.f32.gmra.mxu0 %v260
    %v346 = vpop.f32.mrf.mxu0
    %v347 = vadd.f32 %v245, %v346
    %348 = vmatmul.f32.gmra.mxu0 %v263
    %v349 = vpop.f32.mrf.mxu0
    %v350 = vadd.f32 %v250, %v349
    %351 = vdwg.mxu0
    %352 = vmatpush.msra.mxu0 0.0
    %353 = vmatpush.msra.mxu0 0.0
    %354 = vmatpush.msra.mxu0 0.0
    %355 = vmatpush.msra.mxu0 0.0
    %356 = vmatpush.msra.mxu0 0.0
    %357 = vmatpush.msra.mxu0 0.0
    %358 = vmatpush.msra.mxu0 0.0
    %359 = vmatpush.msra.mxu0 0.0
    %360 = vmatpush.msra.mxu0 0.0
    %361 = vmatpush.msra.mxu0 0.0
    %362 = vmatpush.msra.mxu0 0.0
    %363 = vmatpush.msra.mxu0 0.0
    %364 = vmatpush.msra.mxu0 %v221
    %365 = vmatpush.msra.mxu0 %v217
    %366 = vmatpush.msra.mxu0 %v213
    %367 = vmatpush.msra.mxu0 %v209
    %368 = vmatmul.f32.gmra.mxu0 %v254
    %v369 = vpop.f32.mrf.mxu0
    %v370 = vadd.f32 %v235, %v369
    %371 = vmatmul.f32.gmra.mxu0 %v257
    %v372 = vpop.f32.mrf.mxu0
    %v373 = vadd.f32 %v240, %v372
    %374 = vmatmul.f32.gmra.mxu0 %v260
    %v375 = vpop.f32.mrf.mxu0
    %v376 = vadd.f32 %v245, %v375
    %377 = vmatmul.f32.gmra.mxu0 %v263
    %v378 = vpop.f32.mrf.mxu0
    %v379 = vadd.f32 %v250, %v378
    %380 = vdwg.mxu0
    %v381 = vtanh.pop %v283
    %v382 = vtanh.pop %v312
    %v383 = vtanh.pop %v341
    %v384 = vtanh.pop %v370
    %v385 = vtanh.pop %v286
    %v386 = vtanh.pop %v315
    %v387 = vtanh.pop %v344
    %v388 = vtanh.pop %v373
    %v389 = vtanh.pop %v289
    %v390 = vtanh.pop %v318
    %v391 = vtanh.pop %v347
    %v392 = vtanh.pop %v376
    %v393 = vtanh.pop %v292
    %v394 = vtanh.pop %v321
    %v395 = vtanh.pop %v350
    %v396 = vtanh.pop %v379
    %s397 = scalar_lea.vmem %s1, 64
    %v398 = vld [vmem:[%s397] sm:$0xff]
    %v399 = vld [vmem:[%s397 + $0x8] sm:$0xff]
    %v400 = vld [vmem:[%s397 + $0x10] sm:$0xff]
    %v401 = vld [vmem:[%s397 + $0x18] sm:$0xff]
    %s402 = scalar_lea.vmem %s2, 64
    %v403 = vld [vmem:[%s402] sm:$0xff]
    %v404 = vld [vmem:[%s402 + $0x8] sm:$0xff]
    %v405 = vld [vmem:[%s402 + $0x10] sm:$0xff]
    %v406 = vld [vmem:[%s402 + $0x18] sm:$0xff]
    %408 = vset.pattern.permute.xlu0 0
    %409 = vperm.xlu0 %408, %v403
    %v410 = vpop.permute.xlu0 %409
    %413 = vset.pattern.permute.xlu0 0
    %414 = vperm.xlu0 %413, %v404
    %v415 = vpop.permute.xlu0 %414
    %418 = vset.pattern.permute.xlu0 0
    %419 = vperm.xlu0 %418, %v405
    %v420 = vpop.permute.xlu0 %419
    %423 = vset.pattern.permute.xlu0 0
    %424 = vperm.xlu0 %423, %v406
    %v425 = vpop.permute.xlu0 %424
    %v428 = vsel %vm252, %v398, 0
    %v431 = vsel %vm252, %v399, 0
    %v434 = vsel %vm252, %v400, 0
    %v437 = vsel %vm252, %v401, 0
    %439 = vmatpush.msra.mxu0 0.0
    %440 = vmatpush.msra.mxu0 0.0
    %441 = vmatpush.msra.mxu0 0.0
    %442 = vmatpush.msra.mxu0 0.0
    %443 = vmatpush.msra.mxu0 0.0
    %444 = vmatpush.msra.mxu0 0.0
    %445 = vmatpush.msra.mxu0 0.0
    %446 = vmatpush.msra.mxu0 0.0
    %447 = vmatpush.msra.mxu0 0.0
    %448 = vmatpush.msra.mxu0 0.0
    %449 = vmatpush.msra.mxu0 0.0
    %450 = vmatpush.msra.mxu0 0.0
    %451 = vmatpush.msra.mxu0 %v393
    %452 = vmatpush.msra.mxu0 %v389
    %453 = vmatpush.msra.mxu0 %v385
    %454 = vmatpush.msra.mxu0 %v381
    %455 = vmatmul.f32.gmra.mxu0 %v428
    %v456 = vpop.f32.mrf.mxu0
    %v457 = vadd.f32 %v410, %v456
    %458 = vmatmul.f32.gmra.mxu0 %v431
    %v459 = vpop.f32.mrf.mxu0
    %v460 = vadd.f32 %v415, %v459
    %461 = vmatmul.f32.gmra.mxu0 %v434
    %v462 = vpop.f32.mrf.mxu0
    %v463 = vadd.f32 %v420, %v462
    %464 = vmatmul.f32.gmra.mxu0 %v437
    %v465 = vpop.f32.mrf.mxu0
    %v466 = vadd.f32 %v425, %v465
    %467 = vdwg.mxu0
    %468 = vmatpush.msra.mxu0 0.0
    %469 = vmatpush.msra.mxu0 0.0
    %470 = vmatpush.msra.mxu0 0.0
    %471 = vmatpush.msra.mxu0 0.0
    %472 = vmatpush.msra.mxu0 0.0
    %473 = vmatpush.msra.mxu0 0.0
    %474 = vmatpush.msra.mxu0 0.0
    %475 = vmatpush.msra.mxu0 0.0
    %476 = vmatpush.msra.mxu0 0.0
    %477 = vmatpush.msra.mxu0 0.0
    %478 = vmatpush.msra.mxu0 0.0
    %479 = vmatpush.msra.mxu0 0.0
    %480 = vmatpush.msra.mxu0 %v394
    %481 = vmatpush.msra.mxu0 %v390
    %482 = vmatpush.msra.mxu0 %v386
    %483 = vmatpush.msra.mxu0 %v382
    %484 = vmatmul.f32.gmra.mxu0 %v428
    %v485 = vpop.f32.mrf.mxu0
    %v486 = vadd.f32 %v410, %v485
    %487 = vmatmul.f32.gmra.mxu0 %v431
    %v488 = vpop.f32.mrf.mxu0
    %v489 = vadd.f32 %v415, %v488
    %490 = vmatmul.f32.gmra.mxu0 %v434
    %v491 = vpop.f32.mrf.mxu0
    %v492 = vadd.f32 %v420, %v491
    %493 = vmatmul.f32.gmra.mxu0 %v437
    %v494 = vpop.f32.mrf.mxu0
    %v495 = vadd.f32 %v425, %v494
    %496 = vdwg.mxu0
    %497 = vmatpush.msra.mxu0 0.0
    %498 = vmatpush.msra.mxu0 0.0
    %499 = vmatpush.msra.mxu0 0.0
    %500 = vmatpush.msra.mxu0 0.0
    %501 = vmatpush.msra.mxu0 0.0
    %502 = vmatpush.msra.mxu0 0.0
    %503 = vmatpush.msra.mxu0 0.0
    %504 = vmatpush.msra.mxu0 0.0
    %505 = vmatpush.msra.mxu0 0.0
    %506 = vmatpush.msra.mxu0 0.0
    %507 = vmatpush.msra.mxu0 0.0
    %508 = vmatpush.msra.mxu0 0.0
    %509 = vmatpush.msra.mxu0 %v395
    %510 = vmatpush.msra.mxu0 %v391
    %511 = vmatpush.msra.mxu0 %v387
    %512 = vmatpush.msra.mxu0 %v383
    %513 = vmatmul.f32.gmra.mxu0 %v428
    %v514 = vpop.f32.mrf.mxu0
    %v515 = vadd.f32 %v410, %v514
    %516 = vmatmul.f32.gmra.mxu0 %v431
    %v517 = vpop.f32.mrf.mxu0
    %v518 = vadd.f32 %v415, %v517
    %519 = vmatmul.f32.gmra.mxu0 %v434
    %v520 = vpop.f32.mrf.mxu0
    %v521 = vadd.f32 %v420, %v520
    %522 = vmatmul.f32.gmra.mxu0 %v437
    %v523 = vpop.f32.mrf.mxu0
    %v524 = vadd.f32 %v425, %v523
    %525 = vdwg.mxu0
    %526 = vmatpush.msra.mxu0 0.0
    %527 = vmatpush.msra.mxu0 0.0
    %528 = vmatpush.msra.mxu0 0.0
    %529 = vmatpush.msra.mxu0 0.0
    %530 = vmatpush.msra.mxu0 0.0
    %531 = vmatpush.msra.mxu0 0.0
    %532 = vmatpush.msra.mxu0 0.0
    %533 = vmatpush.msra.mxu0 0.0
    %534 = vmatpush.msra.mxu0 0.0
    %535 = vmatpush.msra.mxu0 0.0
    %536 = vmatpush.msra.mxu0 0.0
    %537 = vmatpush.msra.mxu0 0.0
    %538 = vmatpush.msra.mxu0 %v396
    %539 = vmatpush.msra.mxu0 %v392
    %540 = vmatpush.msra.mxu0 %v388
    %541 = vmatpush.msra.mxu0 %v384
    %542 = vmatmul.f32.gmra.mxu0 %v428
    %v543 = vpop.f32.mrf.mxu0
    %v544 = vadd.f32 %v410, %v543
    %545 = vmatmul.f32.gmra.mxu0 %v431
    %v546 = vpop.f32.mrf.mxu0
    %v547 = vadd.f32 %v415, %v546
    %548 = vmatmul.f32.gmra.mxu0 %v434
    %v549 = vpop.f32.mrf.mxu0
    %v550 = vadd.f32 %v420, %v549
    %551 = vmatmul.f32.gmra.mxu0 %v437
    %v552 = vpop.f32.mrf.mxu0
    %v553 = vadd.f32 %v425, %v552
    %554 = vdwg.mxu0
    %v555 = vtanh.pop %v457
    %v556 = vtanh.pop %v486
    %v557 = vtanh.pop %v515
    %v558 = vtanh.pop %v544
    %v559 = vtanh.pop %v460
    %v560 = vtanh.pop %v489
    %v561 = vtanh.pop %v518
    %v562 = vtanh.pop %v547
    %v563 = vtanh.pop %v463
    %v564 = vtanh.pop %v492
    %v565 = vtanh.pop %v521
    %v566 = vtanh.pop %v550
    %v567 = vtanh.pop %v466
    %v568 = vtanh.pop %v495
    %v569 = vtanh.pop %v524
    %v570 = vtanh.pop %v553
    %s571 = scalar_lea.vmem %s1, 96
    %v572 = vld [vmem:[%s571] sm:$0xff]
    %v573 = vld [vmem:[%s571 + $0x8] sm:$0xff]
    %v574 = vld [vmem:[%s571 + $0x10] sm:$0xff]
    %v575 = vld [vmem:[%s571 + $0x18] sm:$0xff]
    %s576 = scalar_lea.vmem %s2, 96
    %v577 = vld [vmem:[%s576] sm:$0xff]
    %579 = vset.pattern.permute.xlu0 0
    %580 = vperm.xlu0 %579, %v572
    %v581 = vpop.permute.xlu0 %580
    %584 = vset.pattern.permute.xlu0 0
    %585 = vperm.xlu0 %584, %v573
    %v586 = vpop.permute.xlu0 %585
    %589 = vset.pattern.permute.xlu0 0
    %590 = vperm.xlu0 %589, %v574
    %v591 = vpop.permute.xlu0 %590
    %594 = vset.pattern.permute.xlu0 0
    %595 = vperm.xlu0 %594, %v575
    %v596 = vpop.permute.xlu0 %595
    %v598 = vmul.f32 %v581, %v555
    %v599 = vmul.f32 %v581, %v556
    %v600 = vmul.f32 %v581, %v557
    %v601 = vmul.f32 %v581, %v558
    %v602 = vmul.f32 %v586, %v559
    %v603 = vmul.f32 %v586, %v560
    %v604 = vmul.f32 %v586, %v561
    %v605 = vmul.f32 %v586, %v562
    %v606 = vmul.f32 %v591, %v563
    %v607 = vmul.f32 %v591, %v564
    %v608 = vmul.f32 %v591, %v565
    %v609 = vmul.f32 %v591, %v566
    %v610 = vmul.f32 %v596, %v567
    %v611 = vmul.f32 %v596, %v568
    %v612 = vmul.f32 %v596, %v569
    %v613 = vmul.f32 %v596, %v570
    %v614 = vadd.f32 %v598, %v602
    %v615 = vadd.f32 %v614, %v606
    %v616 = vadd.f32 %v615, %v610
    %v617 = vrot.slane %v616, 4
    %v618 = vadd.f32 %v616, %v617
    %v619 = vrot.slane %v618, 2
    %v620 = vadd.f32 %v618, %v619
    %v621 = vrot.slane %v620, 1
    %v622 = vadd.f32 %v620, %v621
    %v623 = vadd.f32 %v599, %v603
    %v624 = vadd.f32 %v623, %v607
    %v625 = vadd.f32 %v624, %v611
    %v626 = vrot.slane %v625, 4
    %v627 = vadd.f32 %v625, %v626
    %v628 = vrot.slane %v627, 2
    %v629 = vadd.f32 %v627, %v628
    %v630 = vrot.slane %v629, 1
    %v631 = vadd.f32 %v629, %v630
    %v632 = vadd.f32 %v600, %v604
    %v633 = vadd.f32 %v632, %v608
    %v634 = vadd.f32 %v633, %v612
    %v635 = vrot.slane %v634, 4
    %v636 = vadd.f32 %v634, %v635
    %v637 = vrot.slane %v636, 2
    %v638 = vadd.f32 %v636, %v637
    %v639 = vrot.slane %v638, 1
    %v640 = vadd.f32 %v638, %v639
    %v641 = vadd.f32 %v601, %v605
    %v642 = vadd.f32 %v641, %v609
    %v643 = vadd.f32 %v642, %v613
    %v644 = vrot.slane %v643, 4
    %v645 = vadd.f32 %v643, %v644
    %v646 = vrot.slane %v645, 2
    %v647 = vadd.f32 %v645, %v646
    %v648 = vrot.slane %v647, 1
    %v649 = vadd.f32 %v647, %v648
    %651 = vset.pattern.permute.xlu0 0
    %652 = vperm.xlu0 %651, %v577
    %v653 = vpop.permute.xlu0 %652
    %v655 = vadd.f32 %v622, %v653
    %v656 = vadd.f32 %v631, %v653
    %v657 = vadd.f32 %v640, %v653
    %v658 = vadd.f32 %v649, %v653
    %v663 = vrot.slane %v656, 7
    %v664 = vrot.slane %v657, 6
    %v665 = vrot.slane %v658, 5
    %vm666 = vcmask 1040384
    %v667 = vsel %vm666, %v655, %v663
    %vm668 = vcmask 1042434
    %v669 = vsel %vm668, %v664, %v665
    %vm670 = vcmask 1041408
    %v671 = vsel %vm670, %v667, %v669
    %v673 = vlaneseq
    %vm674 = vcmp.ge.s32.totalorder %v673, 0
    %vm675 = vcmp.lt.s32.totalorder %v673, 512
    %vm676 = vmand %vm674, %vm675
    %677 = vst.msk [vmem:[#allocation5] sm:$0xf] %vm676, %v671
    // Predicated region
    $region18: #{tpu_custom_call.1} parent=1 // pred_check
      _
    $region19: #{tpu_custom_call.1} parent=1 // pred_check_branch
      %679 = sbr.rel (0) target = $region21
    $region20: #{tpu_custom_call.1} parent=1 // pred_region
      %681 = vsyncadd [#allocation4], 0
      %s683 = sshll.u32 [#allocation5], 4
      %s684 = int_to_ptr.vmem [resolvable:$true] %s683
      %s685 = sshll.u32 %s3, 4
      %s686 = int_to_ptr.hbm [resolvable:$true] %s685
      %688 = dma.vmem_to_hbm [thread:$0]  %s684, 64, %s686, [#allocation4]
    $region21: #{tpu_custom_call.1} parent=1 // pred_fallthru
      _
    // Predicated region
    $region22: #{tpu_custom_call.1} parent=1 // pred_check
      _
    $region23: #{tpu_custom_call.1} parent=1 // pred_check_branch
      %690 = sbr.rel (0) target = $region25
    $region24: #{tpu_custom_call.1} parent=1 // pred_region
      %692 = dma.done [#allocation4], 64
    $region25: #{tpu_custom_call.1} parent=1 // pred_fallthru
      _
    %693 = vsyncpa [#allocation3], 1
    %694 = vsyncpa [#allocation4], 1

</llo_original>
